<compile_context>
chip_gen: v6e
topology: v6e:2x2x1
jax: 0.10.0
libtpu: 0.0.40
codegen_flags: <defaults>
</compile_context>

<pallas_src>
import functools

import jax
import jax.numpy as jnp
from jax.experimental import pallas as pl
from jax.experimental.pallas import tpu as pltpu


def _round_up(x, m):
    return (x + m - 1) // m * m


@functools.lru_cache(maxsize=None)
def _vmem_cap_bytes():
    """~80% of per-core VMEM capacity (headroom for Mosaic internal scratch)."""
    try:
        cap = int(pltpu.get_tpu_info().vmem_capacity_bytes)
    except Exception:
        cap = 64 * 2**20  # conservative fallback: v7x per-TensorCore VMEM
    return (cap * 4) // 5


def _choose_batch_tile(batch, tile_batch):
    """Pick (tile, padded_batch, n_tiles): tile is a multiple of 8, the grid is
    even whenever batch allows (keeps both v7x TensorCores busy), and batch
    padding waste is < 8 rows per tile."""
    tb_cap = max(8, min(_round_up(tile_batch, 8), _round_up(batch, 8)))
    n_tiles = pl.cdiv(batch, tb_cap)
    if batch >= 16:
        n_tiles = _round_up(n_tiles, 2)
    tb = _round_up(pl.cdiv(batch, n_tiles), 8)
    return tb, tb * n_tiles, n_tiles


def _mapping_kernel(z_ref, w0_ref, b0_ref, w_ref, b_ref, out_ref, *,
                    n_rest, n_split):
    """One batch tile: layer 0 (latent -> style) + n_rest style -> style
    layers, each followed by LeakyReLU(0.2). The tile is processed as n_split
    independent row halves so one half's bias/LeakyReLU epilogue (VPU) can
    overlap the other half's matmul (MXU)."""
    tb = z_ref.shape[0]
    half = tb // n_split
    b0 = b0_ref[...]                                   # (1, sp) f32

    def first_layer(z_part):
        # In-kernel bf16 cast (cheap VPU op, hidden under the MXU); f32 acc.
        y = jnp.dot(z_part.astype(jnp.bfloat16), w0_ref[...],
                    preferred_element_type=jnp.float32)
        y = y + b0
        return jnp.maximum(y, 0.2 * y)                 # LeakyReLU(0.2)

    def mid_layer(h_bf16, w, b):
        y = jnp.dot(h_bf16, w, preferred_element_type=jnp.float32)
        y = y + b
        # Carry the inter-layer activation in bf16: identical value feeds the
        # next matmul, half the VMEM / vector-store traffic.
        return jnp.maximum(y, 0.2 * y).astype(jnp.bfloat16)

    parts = tuple(z_ref[pl.ds(s * half, half), :] for s in range(n_split))
    h = tuple(first_layer(p) for p in parts)           # f32 halves

    if n_rest == 0:
        for s in range(n_split):
            out_ref[pl.ds(s * half, half), :] = h[s].astype(out_ref.dtype)
        return

    h = tuple(p.astype(jnp.bfloat16) for p in h)

    def body(i, carry):
        w = w_ref[i]
        b = b_ref[i]
        return tuple(mid_layer(p, w, b) for p in carry)

    h = jax.lax.fori_loop(0, n_rest - 1, body, h, unroll=True)

    # Final layer stays on the f32 path before the store (no bf16 round trip
    # of the value that lands in the output).
    w_last = w_ref[n_rest - 1]
    b_last = b_ref[n_rest - 1]
    for s in range(n_split):
        y = jnp.dot(h[s], w_last, preferred_element_type=jnp.float32)
        y = y + b_last
        y = jnp.maximum(y, 0.2 * y)
        out_ref[pl.ds(s * half, half), :] = y.astype(out_ref.dtype)


@functools.partial(
    jax.jit,
    static_argnames=("latent_dim", "style_dim", "n_rest", "tile_batch"))
def _mapping_forward(z, w0p, b0p, wrp, brp, *, latent_dim, style_dim, n_rest,
                     tile_batch=1024):
    batch = z.shape[0]
    out_dtype = z.dtype
    lp, sp = w0p.shape
    n_w = wrp.shape[0]                     # >= 1 (dummy layer when n_rest == 0)

    tb, bp, n_tiles = _choose_batch_tile(batch, tile_batch)

    # Pad only when needed; z keeps its original dtype (bf16 cast is in-kernel).
    pad_b, pad_l = bp - batch, lp - latent_dim
    zp = z if (pad_b == 0 and pad_l == 0) else jnp.pad(
        z, ((0, pad_b), (0, pad_l)))

    # Half-tile split (MXU/VPU overlap) only when each half stays 8-row aligned
    # and is large enough to matter.
    n_split = 2 if (tb >= 256 and tb % 16 == 0) else 1

    # VMEM: double-buffered z / out tiles, single-buffered resident weights,
    # live f32 + bf16 activations inside the kernel; 2x fudge, per-chip cap.
    z_bytes = z.dtype.itemsize
    o_bytes = jnp.dtype(out_dtype).itemsize
    vmem_needed = (
        2 * tb * lp * z_bytes                    # z tiles (double-buffered)
        + 2 * tb * sp * o_bytes                  # out tiles (double-buffered)
        + tb * sp * (4 + 2)                      # live f32 y + bf16 h
        + lp * sp * 2 + sp * 4                   # layer-0 weight/bias (1 buf)
        + n_w * (sp * sp * 2 + sp * 4))          # remaining layers (1 buf)
    vmem_limit = int(min(_vmem_cap_bytes(), max(8 * 2**20, 2 * vmem_needed)))

    kernel = functools.partial(_mapping_kernel, n_rest=n_rest, n_split=n_split)
    resident = functools.partial(pl.BlockSpec, pipeline_mode=pl.Buffered(1))

    out_padded = pl.pallas_call(
        kernel,
        out_shape=jax.ShapeDtypeStruct((bp, sp), out_dtype),
        grid=(n_tiles,),
        in_specs=[
            pl.BlockSpec((tb, lp), lambda i: (i, 0)),        # z: streamed
            resident((lp, sp), lambda i: (0, 0)),            # w0: resident
            resident((1, sp), lambda i: (0, 0)),             # b0: resident
            resident((n_w, sp, sp), lambda i: (0, 0, 0)),    # w_rest: resident
            resident((n_w, 1, sp), lambda i: (0, 0, 0)),     # b_rest: resident
        ],
        out_specs=pl.BlockSpec((tb, sp), lambda i: (i, 0)),
        compiler_params=pltpu.CompilerParams(
            dimension_semantics=("parallel",),
            vmem_limit_bytes=vmem_limit,
        ),
    )(zp, w0p, b0p, wrp, brp)

    return out_padded[:batch, :style_dim]


def prepare_params(w0, b0, w_rest=None, b_rest=None):
    """One-time parameter prep (hoisted out of the per-call path): pad feature
    dims to lane-dense multiples of 128 and cast weights to bf16. Weights are
    stored (in, out): h @ W + b == PyTorch h @ W.T + b."""
    latent_dim, style_dim = w0.shape
    lp = _round_up(latent_dim, 128)
    sp = _round_up(style_dim, 128)
    n_rest = 0 if w_rest is None else int(w_rest.shape[0])

    w0p = jnp.pad(w0.astype(jnp.bfloat16),
                  ((0, lp - latent_dim), (0, sp - style_dim)))
    b0p = jnp.pad(b0.astype(jnp.float32).reshape(1, style_dim),
                  ((0, 0), (0, sp - style_dim)))
    if n_rest:
        wrp = jnp.pad(w_rest.astype(jnp.bfloat16),
                      ((0, 0), (0, sp - style_dim), (0, sp - style_dim)))
        brp = jnp.pad(b_rest.astype(jnp.float32).reshape(n_rest, 1, style_dim),
                      ((0, 0), (0, 0), (0, sp - style_dim)))
    else:
        # Dummy single layer so BlockSpecs stay non-empty; the kernel's static
        # n_rest == 0 branch never touches it.
        wrp = jnp.zeros((1, sp, sp), jnp.bfloat16)
        brp = jnp.zeros((1, 1, sp), jnp.float32)
    return (w0p, b0p, wrp, brp), (latent_dim, style_dim, n_rest)


def mapping_network(z, params, *, tile_batch=1024):
    (w0p, b0p, wrp, brp), (latent_dim, style_dim, n_rest) = params
    return _mapping_forward(z, w0p, b0p, wrp, brp,
                            latent_dim=latent_dim, style_dim=style_dim,
                            n_rest=n_rest, tile_batch=tile_batch)


def init_params(key, latent_dim, style_dim, n_layers=8):
    """PyTorch nn.Linear-style init: U(-1/sqrt(fan_in), 1/sqrt(fan_in)).
    Weights are already transposed to (in, out) for the kernel."""
    keys = jax.random.split(key, 2 * n_layers)
    bound0 = 1.0 / float(latent_dim) ** 0.5
    w0 = jax.random.uniform(keys[0], (latent_dim, style_dim), jnp.float32,
                            -bound0, bound0)
    b0 = jax.random.uniform(keys[1], (1, style_dim), jnp.float32,
                            -bound0, bound0)
    if n_layers == 1:
        return w0, b0, None, None
    bound = 1.0 / float(style_dim) ** 0.5
    ws = [jax.random.uniform(keys[2 * i], (style_dim, style_dim), jnp.float32,
                             -bound, bound) for i in range(1, n_layers)]
    bs = [jax.random.uniform(keys[2 * i + 1], (1, style_dim), jnp.float32,
                             -bound, bound) for i in range(1, n_layers)]
    return w0, b0, jnp.stack(ws), jnp.stack(bs)


def reference(z, w0, b0, w_rest, b_rest):
    h = z @ w0 + b0
    h = jnp.where(h >= 0, h, 0.2 * h)
    n_rest = 0 if w_rest is None else w_rest.shape[0]
    for i in range(n_rest):
        h = h @ w_rest[i] + b_rest[i]
        h = jnp.where(h >= 0, h, 0.2 * h)
    return h


if __name__ == "__main__":
    latent_dim, style_dim, n_layers = 32, 32, 8
    batch = 8

    key = jax.random.PRNGKey(0)
    k_z, k_p = jax.random.split(key)
    z = jax.random.normal(k_z, (batch, latent_dim), dtype=jnp.float32)
    w0, b0, w_rest, b_rest = init_params(k_p, latent_dim, style_dim, n_layers)

    params = prepare_params(w0, b0, w_rest, b_rest)
    out = mapping_network(z, params)
    out = jax.block_until_ready(out)

    ref = reference(z, w0, b0, w_rest, b_rest)
    assert out.shape == (batch, style_dim), out.shape
    # bf16 MXU matmuls with f32 accumulation -> loosened tolerance vs f32 ref.
    max_err = float(jnp.max(jnp.abs(out - ref)))
    assert jnp.allclose(out, ref, atol=5e-2, rtol=5e-2), (
        f"mismatch vs reference: max abs err {max_err}")
    print("KERNEL_OK")
</pallas_src>

<mosaic_0001>
module attributes {stable_mosaic.version = 11 : i64} {
  func.func @_mapping_kernel(%arg0: i32, %arg1: memref<8x128xf32, #tpu.memory_space<vmem>>, %arg2: memref<128x128xbf16, #tpu.memory_space<vmem>>, %arg3: memref<1x128xf32, #tpu.memory_space<vmem>>, %arg4: memref<7x128x128xbf16, #tpu.memory_space<vmem>>, %arg5: memref<7x1x128xf32, #tpu.memory_space<vmem>>, %arg6: memref<8x128xf32, #tpu.memory_space<vmem>>) attributes {dimension_semantics = [#tpu.dimension_semantics<parallel>], iteration_bounds = array<i64: 1>, scalar_prefetch = 0 : i64, scratch_operands = 0 : i64, tpu.core_type = #tpu.core_type<tc>, window_params = [{transform_indices = @transform_0, window_bounds = array<i64: 8, 128>}, {pipeline_mode = #tpu.pipeline_mode<synchronous>, transform_indices = @transform_1, window_bounds = array<i64: 128, 128>}, {pipeline_mode = #tpu.pipeline_mode<synchronous>, transform_indices = @transform_2, window_bounds = array<i64: 1, 128>}, {pipeline_mode = #tpu.pipeline_mode<synchronous>, transform_indices = @transform_3, window_bounds = array<i64: 7, 128, 128>}, {pipeline_mode = #tpu.pipeline_mode<synchronous>, transform_indices = @transform_4, window_bounds = array<i64: 7, 1, 128>}, {transform_indices = @transform_5, window_bounds = array<i64: 8, 128>}]} {
    %c0 = arith.constant 0 : index
    %c0_0 = arith.constant 0 : index
    %0 = vector.load %arg3[%c0, %c0_0] : memref<1x128xf32, #tpu.memory_space<vmem>>, vector<1x128xf32>
    %c0_1 = arith.constant 0 : index
    %c0_2 = arith.constant 0 : index
    %1 = vector.load %arg1[%c0_1, %c0_2] : memref<8x128xf32, #tpu.memory_space<vmem>>, vector<8x128xf32>
    %2 = arith.truncf %1 : vector<8x128xf32> to vector<8x128xbf16>
    %c0_3 = arith.constant 0 : index
    %c0_4 = arith.constant 0 : index
    %3 = vector.load %arg2[%c0_3, %c0_4] : memref<128x128xbf16, #tpu.memory_space<vmem>>, vector<128x128xbf16>
    %cst = arith.constant dense<0.000000e+00> : vector<8x128xf32>
    %4 = tpu.matmul %2, %3, %cst {dimension_numbers = #tpu.dot_dimension_numbers<[1], [0], [0], [1], [0, 0, 1, 1], [], []>} : vector<8x128xbf16>, vector<128x128xbf16>, vector<8x128xf32> -> vector<8x128xf32>
    %5 = vector.broadcast %0 : vector<1x128xf32> to vector<8x128xf32>
    %6 = arith.addf %4, %5 : vector<8x128xf32>
    %cst_5 = arith.constant 2.000000e-01 : f32
    %7 = vector.broadcast %cst_5 : f32 to vector<8x128xf32>
    %8 = arith.mulf %7, %6 : vector<8x128xf32>
    %9 = arith.maximumf %6, %8 : vector<8x128xf32>
    %10 = arith.truncf %9 : vector<8x128xf32> to vector<8x128xbf16>
    %c0_i32 = arith.constant 0 : i32
    %11 = arith.index_cast %c0_i32 : i32 to index
    %c0_6 = arith.constant 0 : index
    %c0_7 = arith.constant 0 : index
    %12 = vector.load %arg4[%11, %c0_6, %c0_7] : memref<7x128x128xbf16, #tpu.memory_space<vmem>>, vector<1x128x128xbf16>
    %13 = vector.shape_cast %12 : vector<1x128x128xbf16> to vector<128x128xbf16>
    %14 = arith.index_cast %c0_i32 : i32 to index
    %c0_8 = arith.constant 0 : index
    %c0_9 = arith.constant 0 : index
    %15 = vector.load %arg5[%14, %c0_8, %c0_9] : memref<7x1x128xf32, #tpu.memory_space<vmem>>, vector<1x1x128xf32>
    %16 = vector.shape_cast %15 : vector<1x1x128xf32> to vector<1x128xf32>
    %cst_10 = arith.constant dense<0.000000e+00> : vector<8x128xf32>
    %17 = tpu.matmul %10, %13, %cst_10 {dimension_numbers = #tpu.dot_dimension_numbers<[1], [0], [0], [1], [0, 0, 1, 1], [], []>} : vector<8x128xbf16>, vector<128x128xbf16>, vector<8x128xf32> -> vector<8x128xf32>
    %18 = vector.broadcast %16 : vector<1x128xf32> to vector<8x128xf32>
    %19 = arith.addf %17, %18 : vector<8x128xf32>
    %cst_11 = arith.constant 2.000000e-01 : f32
    %20 = vector.broadcast %cst_11 : f32 to vector<8x128xf32>
    %21 = arith.mulf %20, %19 : vector<8x128xf32>
    %22 = arith.maximumf %19, %21 : vector<8x128xf32>
    %23 = arith.truncf %22 : vector<8x128xf32> to vector<8x128xbf16>
    %c1_i32 = arith.constant 1 : i32
    %24 = arith.index_cast %c1_i32 : i32 to index
    %c0_12 = arith.constant 0 : index
    %c0_13 = arith.constant 0 : index
    %25 = vector.load %arg4[%24, %c0_12, %c0_13] : memref<7x128x128xbf16, #tpu.memory_space<vmem>>, vector<1x128x128xbf16>
    %26 = vector.shape_cast %25 : vector<1x128x128xbf16> to vector<128x128xbf16>
    %27 = arith.index_cast %c1_i32 : i32 to index
    %c0_14 = arith.constant 0 : index
    %c0_15 = arith.constant 0 : index
    %28 = vector.load %arg5[%27, %c0_14, %c0_15] : memref<7x1x128xf32, #tpu.memory_space<vmem>>, vector<1x1x128xf32>
    %29 = vector.shape_cast %28 : vector<1x1x128xf32> to vector<1x128xf32>
    %cst_16 = arith.constant dense<0.000000e+00> : vector<8x128xf32>
    %30 = tpu.matmul %23, %26, %cst_16 {dimension_numbers = #tpu.dot_dimension_numbers<[1], [0], [0], [1], [0, 0, 1, 1], [], []>} : vector<8x128xbf16>, vector<128x128xbf16>, vector<8x128xf32> -> vector<8x128xf32>
    %31 = vector.broadcast %29 : vector<1x128xf32> to vector<8x128xf32>
    %32 = arith.addf %30, %31 : vector<8x128xf32>
    %cst_17 = arith.constant 2.000000e-01 : f32
    %33 = vector.broadcast %cst_17 : f32 to vector<8x128xf32>
    %34 = arith.mulf %33, %32 : vector<8x128xf32>
    %35 = arith.maximumf %32, %34 : vector<8x128xf32>
    %36 = arith.truncf %35 : vector<8x128xf32> to vector<8x128xbf16>
    %c2_i32 = arith.constant 2 : i32
    %37 = arith.index_cast %c2_i32 : i32 to index
    %c0_18 = arith.constant 0 : index
    %c0_19 = arith.constant 0 : index
    %38 = vector.load %arg4[%37, %c0_18, %c0_19] : memref<7x128x128xbf16, #tpu.memory_space<vmem>>, vector<1x128x128xbf16>
    %39 = vector.shape_cast %38 : vector<1x128x128xbf16> to vector<128x128xbf16>
    %40 = arith.index_cast %c2_i32 : i32 to index
    %c0_20 = arith.constant 0 : index
    %c0_21 = arith.constant 0 : index
    %41 = vector.load %arg5[%40, %c0_20, %c0_21] : memref<7x1x128xf32, #tpu.memory_space<vmem>>, vector<1x1x128xf32>
    %42 = vector.shape_cast %41 : vector<1x1x128xf32> to vector<1x128xf32>
    %cst_22 = arith.constant dense<0.000000e+00> : vector<8x128xf32>
    %43 = tpu.matmul %36, %39, %cst_22 {dimension_numbers = #tpu.dot_dimension_numbers<[1], [0], [0], [1], [0, 0, 1, 1], [], []>} : vector<8x128xbf16>, vector<128x128xbf16>, vector<8x128xf32> -> vector<8x128xf32>
    %44 = vector.broadcast %42 : vector<1x128xf32> to vector<8x128xf32>
    %45 = arith.addf %43, %44 : vector<8x128xf32>
    %cst_23 = arith.constant 2.000000e-01 : f32
    %46 = vector.broadcast %cst_23 : f32 to vector<8x128xf32>
    %47 = arith.mulf %46, %45 : vector<8x128xf32>
    %48 = arith.maximumf %45, %47 : vector<8x128xf32>
    %49 = arith.truncf %48 : vector<8x128xf32> to vector<8x128xbf16>
    %c3_i32 = arith.constant 3 : i32
    %50 = arith.index_cast %c3_i32 : i32 to index
    %c0_24 = arith.constant 0 : index
    %c0_25 = arith.constant 0 : index
    %51 = vector.load %arg4[%50, %c0_24, %c0_25] : memref<7x128x128xbf16, #tpu.memory_space<vmem>>, vector<1x128x128xbf16>
    %52 = vector.shape_cast %51 : vector<1x128x128xbf16> to vector<128x128xbf16>
    %53 = arith.index_cast %c3_i32 : i32 to index
    %c0_26 = arith.constant 0 : index
    %c0_27 = arith.constant 0 : index
    %54 = vector.load %arg5[%53, %c0_26, %c0_27] : memref<7x1x128xf32, #tpu.memory_space<vmem>>, vector<1x1x128xf32>
    %55 = vector.shape_cast %54 : vector<1x1x128xf32> to vector<1x128xf32>
    %cst_28 = arith.constant dense<0.000000e+00> : vector<8x128xf32>
    %56 = tpu.matmul %49, %52, %cst_28 {dimension_numbers = #tpu.dot_dimension_numbers<[1], [0], [0], [1], [0, 0, 1, 1], [], []>} : vector<8x128xbf16>, vector<128x128xbf16>, vector<8x128xf32> -> vector<8x128xf32>
    %57 = vector.broadcast %55 : vector<1x128xf32> to vector<8x128xf32>
    %58 = arith.addf %56, %57 : vector<8x128xf32>
    %cst_29 = arith.constant 2.000000e-01 : f32
    %59 = vector.broadcast %cst_29 : f32 to vector<8x128xf32>
    %60 = arith.mulf %59, %58 : vector<8x128xf32>
    %61 = arith.maximumf %58, %60 : vector<8x128xf32>
    %62 = arith.truncf %61 : vector<8x128xf32> to vector<8x128xbf16>
    %c4_i32 = arith.constant 4 : i32
    %63 = arith.index_cast %c4_i32 : i32 to index
    %c0_30 = arith.constant 0 : index
    %c0_31 = arith.constant 0 : index
    %64 = vector.load %arg4[%63, %c0_30, %c0_31] : memref<7x128x128xbf16, #tpu.memory_space<vmem>>, vector<1x128x128xbf16>
    %65 = vector.shape_cast %64 : vector<1x128x128xbf16> to vector<128x128xbf16>
    %66 = arith.index_cast %c4_i32 : i32 to index
    %c0_32 = arith.constant 0 : index
    %c0_33 = arith.constant 0 : index
    %67 = vector.load %arg5[%66, %c0_32, %c0_33] : memref<7x1x128xf32, #tpu.memory_space<vmem>>, vector<1x1x128xf32>
    %68 = vector.shape_cast %67 : vector<1x1x128xf32> to vector<1x128xf32>
    %cst_34 = arith.constant dense<0.000000e+00> : vector<8x128xf32>
    %69 = tpu.matmul %62, %65, %cst_34 {dimension_numbers = #tpu.dot_dimension_numbers<[1], [0], [0], [1], [0, 0, 1, 1], [], []>} : vector<8x128xbf16>, vector<128x128xbf16>, vector<8x128xf32> -> vector<8x128xf32>
    %70 = vector.broadcast %68 : vector<1x128xf32> to vector<8x128xf32>
    %71 = arith.addf %69, %70 : vector<8x128xf32>
    %cst_35 = arith.constant 2.000000e-01 : f32
    %72 = vector.broadcast %cst_35 : f32 to vector<8x128xf32>
    %73 = arith.mulf %72, %71 : vector<8x128xf32>
    %74 = arith.maximumf %71, %73 : vector<8x128xf32>
    %75 = arith.truncf %74 : vector<8x128xf32> to vector<8x128xbf16>
    %c5_i32 = arith.constant 5 : i32
    %76 = arith.index_cast %c5_i32 : i32 to index
    %c0_36 = arith.constant 0 : index
    %c0_37 = arith.constant 0 : index
    %77 = vector.load %arg4[%76, %c0_36, %c0_37] : memref<7x128x128xbf16, #tpu.memory_space<vmem>>, vector<1x128x128xbf16>
    %78 = vector.shape_cast %77 : vector<1x128x128xbf16> to vector<128x128xbf16>
    %79 = arith.index_cast %c5_i32 : i32 to index
    %c0_38 = arith.constant 0 : index
    %c0_39 = arith.constant 0 : index
    %80 = vector.load %arg5[%79, %c0_38, %c0_39] : memref<7x1x128xf32, #tpu.memory_space<vmem>>, vector<1x1x128xf32>
    %81 = vector.shape_cast %80 : vector<1x1x128xf32> to vector<1x128xf32>
    %cst_40 = arith.constant dense<0.000000e+00> : vector<8x128xf32>
    %82 = tpu.matmul %75, %78, %cst_40 {dimension_numbers = #tpu.dot_dimension_numbers<[1], [0], [0], [1], [0, 0, 1, 1], [], []>} : vector<8x128xbf16>, vector<128x128xbf16>, vector<8x128xf32> -> vector<8x128xf32>
    %83 = vector.broadcast %81 : vector<1x128xf32> to vector<8x128xf32>
    %84 = arith.addf %82, %83 : vector<8x128xf32>
    %cst_41 = arith.constant 2.000000e-01 : f32
    %85 = vector.broadcast %cst_41 : f32 to vector<8x128xf32>
    %86 = arith.mulf %85, %84 : vector<8x128xf32>
    %87 = arith.maximumf %84, %86 : vector<8x128xf32>
    %88 = arith.truncf %87 : vector<8x128xf32> to vector<8x128xbf16>
    %c6_i32 = arith.constant 6 : i32
    %c6 = arith.constant 6 : index
    %c0_42 = arith.constant 0 : index
    %c0_43 = arith.constant 0 : index
    %89 = vector.load %arg4[%c6, %c0_42, %c0_43] : memref<7x128x128xbf16, #tpu.memory_space<vmem>>, vector<1x128x128xbf16>
    %90 = vector.shape_cast %89 : vector<1x128x128xbf16> to vector<128x128xbf16>
    %c6_44 = arith.constant 6 : index
    %c0_45 = arith.constant 0 : index
    %c0_46 = arith.constant 0 : index
    %91 = vector.load %arg5[%c6_44, %c0_45, %c0_46] : memref<7x1x128xf32, #tpu.memory_space<vmem>>, vector<1x1x128xf32>
    %92 = vector.shape_cast %91 : vector<1x1x128xf32> to vector<1x128xf32>
    %cst_47 = arith.constant dense<0.000000e+00> : vector<8x128xf32>
    %93 = tpu.matmul %88, %90, %cst_47 {dimension_numbers = #tpu.dot_dimension_numbers<[1], [0], [0], [1], [0, 0, 1, 1], [], []>} : vector<8x128xbf16>, vector<128x128xbf16>, vector<8x128xf32> -> vector<8x128xf32>
    %94 = vector.broadcast %92 : vector<1x128xf32> to vector<8x128xf32>
    %95 = arith.addf %93, %94 : vector<8x128xf32>
    %cst_48 = arith.constant 2.000000e-01 : f32
    %96 = vector.broadcast %cst_48 : f32 to vector<8x128xf32>
    %97 = arith.mulf %96, %95 : vector<8x128xf32>
    %98 = arith.maximumf %95, %97 : vector<8x128xf32>
    %c0_49 = arith.constant 0 : index
    %c0_50 = arith.constant 0 : index
    %99 = vector.load %arg6[%c0_49, %c0_50] : memref<8x128xf32, #tpu.memory_space<vmem>>, vector<8x128xf32>
    tpu.vector_store %arg6[%c0_49, %c0_50], %98 {strides = array<i32>} : memref<8x128xf32, #tpu.memory_space<vmem>>, vector<8x128xf32>,
    return
  }
  func.func @transform_0(%arg0: i32) -> (i32, i32) {
    %c0_i32 = arith.constant 0 : i32
    %c0_i32_0 = arith.constant 0 : i32
    return %arg0, %c0_i32 : i32, i32
  }
  func.func @transform_1(%arg0: i32) -> (i32, i32) {
    %c0_i32 = arith.constant 0 : i32
    %c0_i32_0 = arith.constant 0 : i32
    %c0_i32_1 = arith.constant 0 : i32
    return %c0_i32, %c0_i32_0 : i32, i32
  }
  func.func @transform_2(%arg0: i32) -> (i32, i32) {
    %c0_i32 = arith.constant 0 : i32
    %c0_i32_0 = arith.constant 0 : i32
    %c0_i32_1 = arith.constant 0 : i32
    return %c0_i32, %c0_i32_0 : i32, i32
  }
  func.func @transform_3(%arg0: i32) -> (i32, i32, i32) {
    %c0_i32 = arith.constant 0 : i32
    %c0_i32_0 = arith.constant 0 : i32
    %c0_i32_1 = arith.constant 0 : i32
    %c0_i32_2 = arith.constant 0 : i32
    return %c0_i32, %c0_i32_0, %c0_i32_1 : i32, i32, i32
  }
  func.func @transform_4(%arg0: i32) -> (i32, i32, i32) {
    %c0_i32 = arith.constant 0 : i32
    %c0_i32_0 = arith.constant 0 : i32
    %c0_i32_1 = arith.constant 0 : i32
    %c0_i32_2 = arith.constant 0 : i32
    return %c0_i32, %c0_i32_0, %c0_i32_1 : i32, i32, i32
  }
  func.func @transform_5(%arg0: i32) -> (i32, i32) {
    %c0_i32 = arith.constant 0 : i32
    %c0_i32_0 = arith.constant 0 : i32
    return %arg0, %c0_i32 : i32, i32
  }
}

</mosaic_0001>

<llo_original>
// kernel: _mapping_forward.1
$region0: #{_mapping_forward.1}
  #allocation0 [shape = 'u32[]', space=smem, size = 0x4, offset = 0x4, fixed_abs, tag = 'smem constant byte address 0x4 - core index']
  #allocation1 [shape = 'u32[144,128]{1,0:T(1,128)}', space=vmem, size = 0x12000, scoped, tag = 'internal scratch']
  %s0 = inlined_call_operand.vmem [shape: f32[8,128], index: 0, kind: input, shape index: {}]
  %s1 = inlined_call_operand.hbm [shape: bf16[128,128], index: 1, kind: input, shape index: {}]
  %s2 = inlined_call_operand.vmem [shape: f32[1,128], index: 2, kind: input, shape index: {}]
  %s3 = inlined_call_operand.hbm [shape: bf16[7,128,128], index: 3, kind: input, shape index: {}]
  %s4 = inlined_call_operand.vmem [shape: f32[7,1,128], index: 4, kind: input, shape index: {}]
  %s5 = inlined_call_operand.hbm [shape: f32[8,128], index: 5, kind: output, shape index: {}]
  %s6 = sld [smem:[#allocation0]]
  $region38: #{_mapping_forward.1} parent=0
    _
  %s8 = ssub.s32 1, %s6
  %s9 = scalar_select 0, %s8, %s6
  $region1: #{_mapping_forward.1} parent=0
    #allocation2 [shape = 'u8[32768]{0}', space=vmem, size = 0x8000, scoped, tag = 'input window, operand 1, single buffered']
    #allocation3 [shape = 's32[1]{0}', space=sflag, size = 0x4, scoped, tag = 'scoped memory for _mapping_forward.1']
    #allocation4 [shape = 's32[1]{0}', space=sflag, size = 0x4, scoped, tag = 'scoped memory for _mapping_forward.1']
    #allocation5 [shape = 'u8[229376]{0}', space=vmem, size = 0x38000, scoped, tag = 'input window, operand 3, single buffered']
    #allocation6 [shape = 's32[1]{0}', space=sflag, size = 0x4, scoped, tag = 'scoped memory for _mapping_forward.1']
    #allocation7 [shape = 'u8[4096]{0}', space=vmem, size = 0x1000, scoped, tag = 'output window, operand 0, single buffered']
    %10 = vsyncpa [#allocation3], 0
    %11 = vsyncpa [#allocation6], 0
    %12 = vsyncpa [#allocation4], 0
    // Predicated region
    $region2: #{_mapping_forward.1} parent=1 // pred_check
      _
    $region3: #{_mapping_forward.1} parent=1 // pred_check_branch
      %14 = sbr.rel (0) target = $region5
    $region4: #{_mapping_forward.1} parent=1 // pred_region
      _
    $region5: #{_mapping_forward.1} parent=1 // pred_fallthru
      _
    // Predicated region
    $region6: #{_mapping_forward.1} parent=1 // pred_check
      _
    $region7: #{_mapping_forward.1} parent=1 // pred_check_branch
      %16 = sbr.rel (0) target = $region9
    $region8: #{_mapping_forward.1} parent=1 // pred_region
      %s18 = ssub.s32 1024, 1024
      %19 = vsyncadd [#allocation3], %s18
      %s20 = sshll.u32 [#allocation2], 4
      %s21 = int_to_ptr.vmem [resolvable:$true] %s20
      %26 = dma.hbm_to_vmem [thread:$0]  %s1, 1024, %s21, [#allocation3], 64, 64, 4
    $region9: #{_mapping_forward.1} parent=1 // pred_fallthru
      _
    // Predicated region
    $region10: #{_mapping_forward.1} parent=1 // pred_check
      _
    $region11: #{_mapping_forward.1} parent=1 // pred_check_branch
      %28 = sbr.rel (0) target = $region13
    $region12: #{_mapping_forward.1} parent=1 // pred_region
      _
    $region13: #{_mapping_forward.1} parent=1 // pred_fallthru
      _
    // Predicated region
    $region14: #{_mapping_forward.1} parent=1 // pred_check
      _
    $region15: #{_mapping_forward.1} parent=1 // pred_check_branch
      %30 = sbr.rel (0) target = $region17
    $region16: #{_mapping_forward.1} parent=1 // pred_region
      %s32 = ssub.s32 7168, 7168
      %33 = vsyncadd [#allocation6], %s32
      %s34 = sshll.u32 [#allocation5], 4
      %s35 = int_to_ptr.vmem [resolvable:$true] %s34
      %40 = dma.hbm_to_vmem [thread:$0]  %s3, 7168, %s35, [#allocation6], 64, 64, 4
    $region17: #{_mapping_forward.1} parent=1 // pred_fallthru
      _
    // Predicated region
    $region18: #{_mapping_forward.1} parent=1 // pred_check
      _
    $region19: #{_mapping_forward.1} parent=1 // pred_check_branch
      %42 = sbr.rel (0) target = $region21
    $region20: #{_mapping_forward.1} parent=1 // pred_region
      _
    $region21: #{_mapping_forward.1} parent=1 // pred_fallthru
      _
    // Predicated region
    $region22: #{_mapping_forward.1} parent=1 // pred_check
      _
    $region23: #{_mapping_forward.1} parent=1 // pred_check_branch
      %44 = sbr.rel (0) target = $region25
    $region24: #{_mapping_forward.1} parent=1 // pred_region
      %45 = dma.done [#allocation3], 1024
    $region25: #{_mapping_forward.1} parent=1 // pred_fallthru
      _
    // Predicated region
    $region26: #{_mapping_forward.1} parent=1 // pred_check
      _
    $region27: #{_mapping_forward.1} parent=1 // pred_check_branch
      %47 = sbr.rel (0) target = $region29
    $region28: #{_mapping_forward.1} parent=1 // pred_region
      %48 = dma.done [#allocation6], 7168
    $region29: #{_mapping_forward.1} parent=1 // pred_fallthru
      _
    %v50 = vld [vmem:[%s2] sm:$0x1]
    %v51 = vld [vmem:[%s0] sm:$0xff]
    %v52 = vpack.c.bf16 %v51, %v51
    %v53 = vld [vmem:[#allocation2] sm:$0xf]
    %v54 = vld [vmem:[#allocation2 + $0x4] sm:$0xf]
    %v55 = vld [vmem:[#allocation2 + $0x8] sm:$0xf]
    %v56 = vld [vmem:[#allocation2 + $0xc] sm:$0xf]
    %v57 = vld [vmem:[#allocation2 + $0x10] sm:$0xf]
    %v58 = vld [vmem:[#allocation2 + $0x14] sm:$0xf]
    %v59 = vld [vmem:[#allocation2 + $0x18] sm:$0xf]
    %v60 = vld [vmem:[#allocation2 + $0x1c] sm:$0xf]
    %v61 = vld [vmem:[#allocation2 + $0x20] sm:$0xf]
    %v62 = vld [vmem:[#allocation2 + $0x24] sm:$0xf]
    %v63 = vld [vmem:[#allocation2 + $0x28] sm:$0xf]
    %v64 = vld [vmem:[#allocation2 + $0x2c] sm:$0xf]
    %v65 = vld [vmem:[#allocation2 + $0x30] sm:$0xf]
    %v66 = vld [vmem:[#allocation2 + $0x34] sm:$0xf]
    %v67 = vld [vmem:[#allocation2 + $0x38] sm:$0xf]
    %v68 = vld [vmem:[#allocation2 + $0x3c] sm:$0xf]
    %v70 = vlaneseq
    %v71 = vshrl.u32 %v70, 7
    %v72 = vsub.s32 0, %v71
    %v73 = vrot.slane %v50, %v72
    %v91 = vunpack.c.l.b16 %v53
    %v92 = vunpack.c.l.b16 %v54
    %v93 = vunpack.c.l.b16 %v55
    %v94 = vunpack.c.l.b16 %v56
    %v95 = vunpack.c.l.b16 %v57
    %v96 = vunpack.c.l.b16 %v58
    %v97 = vunpack.c.l.b16 %v59
    %v98 = vunpack.c.l.b16 %v60
    %v99 = vunpack.c.l.b16 %v61
    %v100 = vunpack.c.l.b16 %v62
    %v101 = vunpack.c.l.b16 %v63
    %v102 = vunpack.c.l.b16 %v64
    %v103 = vunpack.c.l.b16 %v65
    %v104 = vunpack.c.l.b16 %v66
    %v105 = vunpack.c.l.b16 %v67
    %v106 = vunpack.c.l.b16 %v68
    %v107 = vpack.c.b16 %v92, %v91
    %v108 = vpack.c.b16 %v94, %v93
    %v109 = vpack.c.b16 %v96, %v95
    %v110 = vpack.c.b16 %v98, %v97
    %v111 = vpack.c.b16 %v100, %v99
    %v112 = vpack.c.b16 %v102, %v101
    %v113 = vpack.c.b16 %v104, %v103
    %v114 = vpack.c.b16 %v106, %v105
    %123 = vmatprep.subr.bf16.mxu0 0
    %124 = vmatpush1.bf16.msra.mxu0 %v114
    %125 = vmatprep.subr.bf16.mxu0 0
    %126 = vmatpush1.bf16.msra.mxu0 %v113
    %127 = vmatprep.subr.bf16.mxu0 0
    %128 = vmatpush1.bf16.msra.mxu0 %v112
    %129 = vmatprep.subr.bf16.mxu0 0
    %130 = vmatpush1.bf16.msra.mxu0 %v111
    %131 = vmatprep.subr.bf16.mxu0 0
    %132 = vmatpush1.bf16.msra.mxu0 %v110
    %133 = vmatprep.subr.bf16.mxu0 0
    %134 = vmatpush1.bf16.msra.mxu0 %v109
    %135 = vmatprep.subr.bf16.mxu0 0
    %136 = vmatpush1.bf16.msra.mxu0 %v108
    %137 = vmatprep.subr.bf16.mxu0 0
    %138 = vmatpush1.bf16.msra.mxu0 %v107
    %139 = vmatprep.subr.bf16.mxu0 0
    %140 = vmatpush2.bf16.msra.mxu0 0
    %141 = vmatprep.subr.bf16.mxu0 0
    %142 = vmatpush2.bf16.msra.mxu0 0
    %143 = vmatprep.subr.bf16.mxu0 0
    %144 = vmatpush2.bf16.msra.mxu0 0
    %145 = vmatprep.subr.bf16.mxu0 0
    %146 = vmatpush2.bf16.msra.mxu0 0
    %147 = vmatprep.subr.bf16.mxu0 0
    %148 = vmatpush2.bf16.msra.mxu0 0
    %149 = vmatprep.subr.bf16.mxu0 0
    %150 = vmatpush2.bf16.msra.mxu0 0
    %151 = vmatprep.subr.bf16.mxu0 0
    %152 = vmatpush2.bf16.msra.mxu0 0
    %153 = vmatprep.subr.bf16.mxu0 0
    %154 = vmatpush2.bf16.msra.mxu0 0
    %155 = vmatprep.mubr.bf16.mxu0 0
    %156 = vmatmul.mubr.bf16.gmra.mxu0 %v52
    %v157 = vpop.f32.mrf.mxu0
    %v158 = vadd.f32 %v73, %v157
    %v159 = vpop.f32.mrf.mxu0
    %v160 = vpop.f32.mrf.mxu0
    %v161 = vpop.f32.mrf.mxu0
    %162 = vdwg.mxu0
    %v163 = vmul.f32 %v158, 0.2
    %v164 = vmax.f32 %v158, %v163
    %v165 = vpack.c.bf16 %v164, %v164
    %v166 = vld [vmem:[#allocation5] sm:$0xf]
    %v167 = vld [vmem:[#allocation5 + $0x4] sm:$0xf]
    %v168 = vld [vmem:[#allocation5 + $0x8] sm:$0xf]
    %v169 = vld [vmem:[#allocation5 + $0xc] sm:$0xf]
    %v170 = vld [vmem:[#allocation5 + $0x10] sm:$0xf]
    %v171 = vld [vmem:[#allocation5 + $0x14] sm:$0xf]
    %v172 = vld [vmem:[#allocation5 + $0x18] sm:$0xf]
    %v173 = vld [vmem:[#allocation5 + $0x1c] sm:$0xf]
    %v174 = vld [vmem:[#allocation5 + $0x20] sm:$0xf]
    %v175 = vld [vmem:[#allocation5 + $0x24] sm:$0xf]
    %v176 = vld [vmem:[#allocation5 + $0x28] sm:$0xf]
    %v177 = vld [vmem:[#allocation5 + $0x2c] sm:$0xf]
    %v178 = vld [vmem:[#allocation5 + $0x30] sm:$0xf]
    %v179 = vld [vmem:[#allocation5 + $0x34] sm:$0xf]
    %v180 = vld [vmem:[#allocation5 + $0x38] sm:$0xf]
    %v181 = vld [vmem:[#allocation5 + $0x3c] sm:$0xf]
    %v182 = vld [vmem:[%s4] sm:$0x1]
    %v184 = vlaneseq
    %v185 = vshrl.u32 %v184, 7
    %v186 = vsub.s32 0, %v185
    %v187 = vrot.slane %v182, %v186
    %v205 = vunpack.c.l.b16 %v166
    %v206 = vunpack.c.l.b16 %v167
    %v207 = vunpack.c.l.b16 %v168
    %v208 = vunpack.c.l.b16 %v169
    %v209 = vunpack.c.l.b16 %v170
    %v210 = vunpack.c.l.b16 %v171
    %v211 = vunpack.c.l.b16 %v172
    %v212 = vunpack.c.l.b16 %v173
    %v213 = vunpack.c.l.b16 %v174
    %v214 = vunpack.c.l.b16 %v175
    %v215 = vunpack.c.l.b16 %v176
    %v216 = vunpack.c.l.b16 %v177
    %v217 = vunpack.c.l.b16 %v178
    %v218 = vunpack.c.l.b16 %v179
    %v219 = vunpack.c.l.b16 %v180
    %v220 = vunpack.c.l.b16 %v181
    %v221 = vpack.c.b16 %v206, %v205
    %v222 = vpack.c.b16 %v208, %v207
    %v223 = vpack.c.b16 %v210, %v209
    %v224 = vpack.c.b16 %v212, %v211
    %v225 = vpack.c.b16 %v214, %v213
    %v226 = vpack.c.b16 %v216, %v215
    %v227 = vpack.c.b16 %v218, %v217
    %v228 = vpack.c.b16 %v220, %v219
    %237 = vmatprep.subr.bf16.mxu0 0
    %238 = vmatpush1.bf16.msra.mxu0 %v228
    %239 = vmatprep.subr.bf16.mxu0 0
    %240 = vmatpush1.bf16.msra.mxu0 %v227
    %241 = vmatprep.subr.bf16.mxu0 0
    %242 = vmatpush1.bf16.msra.mxu0 %v226
    %243 = vmatprep.subr.bf16.mxu0 0
    %244 = vmatpush1.bf16.msra.mxu0 %v225
    %245 = vmatprep.subr.bf16.mxu0 0
    %246 = vmatpush1.bf16.msra.mxu0 %v224
    %247 = vmatprep.subr.bf16.mxu0 0
    %248 = vmatpush1.bf16.msra.mxu0 %v223
    %249 = vmatprep.subr.bf16.mxu0 0
    %250 = vmatpush1.bf16.msra.mxu0 %v222
    %251 = vmatprep.subr.bf16.mxu0 0
    %252 = vmatpush1.bf16.msra.mxu0 %v221
    %253 = vmatprep.subr.bf16.mxu0 0
    %254 = vmatpush2.bf16.msra.mxu0 0
    %255 = vmatprep.subr.bf16.mxu0 0
    %256 = vmatpush2.bf16.msra.mxu0 0
    %257 = vmatprep.subr.bf16.mxu0 0
    %258 = vmatpush2.bf16.msra.mxu0 0
    %259 = vmatprep.subr.bf16.mxu0 0
    %260 = vmatpush2.bf16.msra.mxu0 0
    %261 = vmatprep.subr.bf16.mxu0 0
    %262 = vmatpush2.bf16.msra.mxu0 0
    %263 = vmatprep.subr.bf16.mxu0 0
    %264 = vmatpush2.bf16.msra.mxu0 0
    %265 = vmatprep.subr.bf16.mxu0 0
    %266 = vmatpush2.bf16.msra.mxu0 0
    %267 = vmatprep.subr.bf16.mxu0 0
    %268 = vmatpush2.bf16.msra.mxu0 0
    %269 = vmatprep.mubr.bf16.mxu0 0
    %270 = vmatmul.mubr.bf16.gmra.mxu0 %v165
    %v271 = vpop.f32.mrf.mxu0
    %v272 = vadd.f32 %v187, %v271
    %v273 = vpop.f32.mrf.mxu0
    %v274 = vpop.f32.mrf.mxu0
    %v275 = vpop.f32.mrf.mxu0
    %276 = vdwg.mxu0
    %v277 = vmul.f32 %v272, 0.2
    %v278 = vmax.f32 %v272, %v277
    %v279 = vpack.c.bf16 %v278, %v278
    %s280 = scalar_lea.vmem [#allocation5], 64
    %v281 = vld [vmem:[%s280] sm:$0xf]
    %v282 = vld [vmem:[%s280 + $0x4] sm:$0xf]
    %v283 = vld [vmem:[%s280 + $0x8] sm:$0xf]
    %v284 = vld [vmem:[%s280 + $0xc] sm:$0xf]
    %v285 = vld [vmem:[%s280 + $0x10] sm:$0xf]
    %v286 = vld [vmem:[%s280 + $0x14] sm:$0xf]
    %v287 = vld [vmem:[%s280 + $0x18] sm:$0xf]
    %v288 = vld [vmem:[%s280 + $0x1c] sm:$0xf]
    %v289 = vld [vmem:[%s280 + $0x20] sm:$0xf]
    %v290 = vld [vmem:[%s280 + $0x24] sm:$0xf]
    %v291 = vld [vmem:[%s280 + $0x28] sm:$0xf]
    %v292 = vld [vmem:[%s280 + $0x2c] sm:$0xf]
    %v293 = vld [vmem:[%s280 + $0x30] sm:$0xf]
    %v294 = vld [vmem:[%s280 + $0x34] sm:$0xf]
    %v295 = vld [vmem:[%s280 + $0x38] sm:$0xf]
    %v296 = vld [vmem:[%s280 + $0x3c] sm:$0xf]
    %s297 = scalar_lea.vmem %s4, 1
    %v298 = vld [vmem:[%s297] sm:$0x1]
    %v300 = vlaneseq
    %v301 = vshrl.u32 %v300, 7
    %v302 = vsub.s32 0, %v301
    %v303 = vrot.slane %v298, %v302
    %v321 = vunpack.c.l.b16 %v281
    %v322 = vunpack.c.l.b16 %v282
    %v323 = vunpack.c.l.b16 %v283
    %v324 = vunpack.c.l.b16 %v284
    %v325 = vunpack.c.l.b16 %v285
    %v326 = vunpack.c.l.b16 %v286
    %v327 = vunpack.c.l.b16 %v287
    %v328 = vunpack.c.l.b16 %v288
    %v329 = vunpack.c.l.b16 %v289
    %v330 = vunpack.c.l.b16 %v290
    %v331 = vunpack.c.l.b16 %v291
    %v332 = vunpack.c.l.b16 %v292
    %v333 = vunpack.c.l.b16 %v293
    %v334 = vunpack.c.l.b16 %v294
    %v335 = vunpack.c.l.b16 %v295
    %v336 = vunpack.c.l.b16 %v296
    %v337 = vpack.c.b16 %v322, %v321
    %v338 = vpack.c.b16 %v324, %v323
    %v339 = vpack.c.b16 %v326, %v325
    %v340 = vpack.c.b16 %v328, %v327
    %v341 = vpack.c.b16 %v330, %v329
    %v342 = vpack.c.b16 %v332, %v331
    %v343 = vpack.c.b16 %v334, %v333
    %v344 = vpack.c.b16 %v336, %v335
    %353 = vmatprep.subr.bf16.mxu0 0
    %354 = vmatpush1.bf16.msra.mxu0 %v344
    %355 = vmatprep.subr.bf16.mxu0 0
    %356 = vmatpush1.bf16.msra.mxu0 %v343
    %357 = vmatprep.subr.bf16.mxu0 0
    %358 = vmatpush1.bf16.msra.mxu0 %v342
    %359 = vmatprep.subr.bf16.mxu0 0
    %360 = vmatpush1.bf16.msra.mxu0 %v341
    %361 = vmatprep.subr.bf16.mxu0 0
    %362 = vmatpush1.bf16.msra.mxu0 %v340
    %363 = vmatprep.subr.bf16.mxu0 0
    %364 = vmatpush1.bf16.msra.mxu0 %v339
    %365 = vmatprep.subr.bf16.mxu0 0
    %366 = vmatpush1.bf16.msra.mxu0 %v338
    %367 = vmatprep.subr.bf16.mxu0 0
    %368 = vmatpush1.bf16.msra.mxu0 %v337
    %369 = vmatprep.subr.bf16.mxu0 0
    %370 = vmatpush2.bf16.msra.mxu0 0
    %371 = vmatprep.subr.bf16.mxu0 0
    %372 = vmatpush2.bf16.msra.mxu0 0
    %373 = vmatprep.subr.bf16.mxu0 0
    %374 = vmatpush2.bf16.msra.mxu0 0
    %375 = vmatprep.subr.bf16.mxu0 0
    %376 = vmatpush2.bf16.msra.mxu0 0
    %377 = vmatprep.subr.bf16.mxu0 0
    %378 = vmatpush2.bf16.msra.mxu0 0
    %379 = vmatprep.subr.bf16.mxu0 0
    %380 = vmatpush2.bf16.msra.mxu0 0
    %381 = vmatprep.subr.bf16.mxu0 0
    %382 = vmatpush2.bf16.msra.mxu0 0
    %383 = vmatprep.subr.bf16.mxu0 0
    %384 = vmatpush2.bf16.msra.mxu0 0
    %385 = vmatprep.mubr.bf16.mxu0 0
    %386 = vmatmul.mubr.bf16.gmra.mxu0 %v279
    %v387 = vpop.f32.mrf.mxu0
    %v388 = vadd.f32 %v303, %v387
    %v389 = vpop.f32.mrf.mxu0
    %v390 = vpop.f32.mrf.mxu0
    %v391 = vpop.f32.mrf.mxu0
    %392 = vdwg.mxu0
    %v393 = vmul.f32 %v388, 0.2
    %v394 = vmax.f32 %v388, %v393
    %v395 = vpack.c.bf16 %v394, %v394
    %s396 = scalar_lea.vmem [#allocation5], 128
    %v397 = vld [vmem:[%s396] sm:$0xf]
    %v398 = vld [vmem:[%s396 + $0x4] sm:$0xf]
    %v399 = vld [vmem:[%s396 + $0x8] sm:$0xf]
    %v400 = vld [vmem:[%s396 + $0xc] sm:$0xf]
    %v401 = vld [vmem:[%s396 + $0x10] sm:$0xf]
    %v402 = vld [vmem:[%s396 + $0x14] sm:$0xf]
    %v403 = vld [vmem:[%s396 + $0x18] sm:$0xf]
    %v404 = vld [vmem:[%s396 + $0x1c] sm:$0xf]
    %v405 = vld [vmem:[%s396 + $0x20] sm:$0xf]
    %v406 = vld [vmem:[%s396 + $0x24] sm:$0xf]
    %v407 = vld [vmem:[%s396 + $0x28] sm:$0xf]
    %v408 = vld [vmem:[%s396 + $0x2c] sm:$0xf]
    %v409 = vld [vmem:[%s396 + $0x30] sm:$0xf]
    %v410 = vld [vmem:[%s396 + $0x34] sm:$0xf]
    %v411 = vld [vmem:[%s396 + $0x38] sm:$0xf]
    %v412 = vld [vmem:[%s396 + $0x3c] sm:$0xf]
    %s413 = scalar_lea.vmem %s4, 2
    %v414 = vld [vmem:[%s413] sm:$0x1]
    %v416 = vlaneseq
    %v417 = vshrl.u32 %v416, 7
    %v418 = vsub.s32 0, %v417
    %v419 = vrot.slane %v414, %v418
    %v437 = vunpack.c.l.b16 %v397
    %v438 = vunpack.c.l.b16 %v398
    %v439 = vunpack.c.l.b16 %v399
    %v440 = vunpack.c.l.b16 %v400
    %v441 = vunpack.c.l.b16 %v401
    %v442 = vunpack.c.l.b16 %v402
    %v443 = vunpack.c.l.b16 %v403
    %v444 = vunpack.c.l.b16 %v404
    %v445 = vunpack.c.l.b16 %v405
    %v446 = vunpack.c.l.b16 %v406
    %v447 = vunpack.c.l.b16 %v407
    %v448 = vunpack.c.l.b16 %v408
    %v449 = vunpack.c.l.b16 %v409
    %v450 = vunpack.c.l.b16 %v410
    %v451 = vunpack.c.l.b16 %v411
    %v452 = vunpack.c.l.b16 %v412
    %v453 = vpack.c.b16 %v438, %v437
    %v454 = vpack.c.b16 %v440, %v439
    %v455 = vpack.c.b16 %v442, %v441
    %v456 = vpack.c.b16 %v444, %v443
    %v457 = vpack.c.b16 %v446, %v445
    %v458 = vpack.c.b16 %v448, %v447
    %v459 = vpack.c.b16 %v450, %v449
    %v460 = vpack.c.b16 %v452, %v451
    %469 = vmatprep.subr.bf16.mxu0 0
    %470 = vmatpush1.bf16.msra.mxu0 %v460
    %471 = vmatprep.subr.bf16.mxu0 0
    %472 = vmatpush1.bf16.msra.mxu0 %v459
    %473 = vmatprep.subr.bf16.mxu0 0
    %474 = vmatpush1.bf16.msra.mxu0 %v458
    %475 = vmatprep.subr.bf16.mxu0 0
    %476 = vmatpush1.bf16.msra.mxu0 %v457
    %477 = vmatprep.subr.bf16.mxu0 0
    %478 = vmatpush1.bf16.msra.mxu0 %v456
    %479 = vmatprep.subr.bf16.mxu0 0
    %480 = vmatpush1.bf16.msra.mxu0 %v455
    %481 = vmatprep.subr.bf16.mxu0 0
    %482 = vmatpush1.bf16.msra.mxu0 %v454
    %483 = vmatprep.subr.bf16.mxu0 0
    %484 = vmatpush1.bf16.msra.mxu0 %v453
    %485 = vmatprep.subr.bf16.mxu0 0
    %486 = vmatpush2.bf16.msra.mxu0 0
    %487 = vmatprep.subr.bf16.mxu0 0
    %488 = vmatpush2.bf16.msra.mxu0 0
    %489 = vmatprep.subr.bf16.mxu0 0
    %490 = vmatpush2.bf16.msra.mxu0 0
    %491 = vmatprep.subr.bf16.mxu0 0
    %492 = vmatpush2.bf16.msra.mxu0 0
    %493 = vmatprep.subr.bf16.mxu0 0
    %494 = vmatpush2.bf16.msra.mxu0 0
    %495 = vmatprep.subr.bf16.mxu0 0
    %496 = vmatpush2.bf16.msra.mxu0 0
    %497 = vmatprep.subr.bf16.mxu0 0
    %498 = vmatpush2.bf16.msra.mxu0 0
    %499 = vmatprep.subr.bf16.mxu0 0
    %500 = vmatpush2.bf16.msra.mxu0 0
    %501 = vmatprep.mubr.bf16.mxu0 0
    %502 = vmatmul.mubr.bf16.gmra.mxu0 %v395
    %v503 = vpop.f32.mrf.mxu0
    %v504 = vadd.f32 %v419, %v503
    %v505 = vpop.f32.mrf.mxu0
    %v506 = vpop.f32.mrf.mxu0
    %v507 = vpop.f32.mrf.mxu0
    %508 = vdwg.mxu0
    %v509 = vmul.f32 %v504, 0.2
    %v510 = vmax.f32 %v504, %v509
    %v511 = vpack.c.bf16 %v510, %v510
    %s512 = scalar_lea.vmem [#allocation5], 192
    %v513 = vld [vmem:[%s512] sm:$0xf]
    %v514 = vld [vmem:[%s512 + $0x4] sm:$0xf]
    %v515 = vld [vmem:[%s512 + $0x8] sm:$0xf]
    %v516 = vld [vmem:[%s512 + $0xc] sm:$0xf]
    %v517 = vld [vmem:[%s512 + $0x10] sm:$0xf]
    %v518 = vld [vmem:[%s512 + $0x14] sm:$0xf]
    %v519 = vld [vmem:[%s512 + $0x18] sm:$0xf]
    %v520 = vld [vmem:[%s512 + $0x1c] sm:$0xf]
    %v521 = vld [vmem:[%s512 + $0x20] sm:$0xf]
    %v522 = vld [vmem:[%s512 + $0x24] sm:$0xf]
    %v523 = vld [vmem:[%s512 + $0x28] sm:$0xf]
    %v524 = vld [vmem:[%s512 + $0x2c] sm:$0xf]
    %v525 = vld [vmem:[%s512 + $0x30] sm:$0xf]
    %v526 = vld [vmem:[%s512 + $0x34] sm:$0xf]
    %v527 = vld [vmem:[%s512 + $0x38] sm:$0xf]
    %v528 = vld [vmem:[%s512 + $0x3c] sm:$0xf]
    %s529 = scalar_lea.vmem %s4, 3
    %v530 = vld [vmem:[%s529] sm:$0x1]
    %v532 = vlaneseq
    %v533 = vshrl.u32 %v532, 7
    %v534 = vsub.s32 0, %v533
    %v535 = vrot.slane %v530, %v534
    %v553 = vunpack.c.l.b16 %v513
    %v554 = vunpack.c.l.b16 %v514
    %v555 = vunpack.c.l.b16 %v515
    %v556 = vunpack.c.l.b16 %v516
    %v557 = vunpack.c.l.b16 %v517
    %v558 = vunpack.c.l.b16 %v518
    %v559 = vunpack.c.l.b16 %v519
    %v560 = vunpack.c.l.b16 %v520
    %v561 = vunpack.c.l.b16 %v521
    %v562 = vunpack.c.l.b16 %v522
    %v563 = vunpack.c.l.b16 %v523
    %v564 = vunpack.c.l.b16 %v524
    %v565 = vunpack.c.l.b16 %v525
    %v566 = vunpack.c.l.b16 %v526
    %v567 = vunpack.c.l.b16 %v527
    %v568 = vunpack.c.l.b16 %v528
    %v569 = vpack.c.b16 %v554, %v553
    %v570 = vpack.c.b16 %v556, %v555
    %v571 = vpack.c.b16 %v558, %v557
    %v572 = vpack.c.b16 %v560, %v559
    %v573 = vpack.c.b16 %v562, %v561
    %v574 = vpack.c.b16 %v564, %v563
    %v575 = vpack.c.b16 %v566, %v565
    %v576 = vpack.c.b16 %v568, %v567
    %585 = vmatprep.subr.bf16.mxu0 0
    %586 = vmatpush1.bf16.msra.mxu0 %v576
    %587 = vmatprep.subr.bf16.mxu0 0
    %588 = vmatpush1.bf16.msra.mxu0 %v575
    %589 = vmatprep.subr.bf16.mxu0 0
    %590 = vmatpush1.bf16.msra.mxu0 %v574
    %591 = vmatprep.subr.bf16.mxu0 0
    %592 = vmatpush1.bf16.msra.mxu0 %v573
    %593 = vmatprep.subr.bf16.mxu0 0
    %594 = vmatpush1.bf16.msra.mxu0 %v572
    %595 = vmatprep.subr.bf16.mxu0 0
    %596 = vmatpush1.bf16.msra.mxu0 %v571
    %597 = vmatprep.subr.bf16.mxu0 0
    %598 = vmatpush1.bf16.msra.mxu0 %v570
    %599 = vmatprep.subr.bf16.mxu0 0
    %600 = vmatpush1.bf16.msra.mxu0 %v569
    %601 = vmatprep.subr.bf16.mxu0 0
    %602 = vmatpush2.bf16.msra.mxu0 0
    %603 = vmatprep.subr.bf16.mxu0 0
    %604 = vmatpush2.bf16.msra.mxu0 0
    %605 = vmatprep.subr.bf16.mxu0 0
    %606 = vmatpush2.bf16.msra.mxu0 0
    %607 = vmatprep.subr.bf16.mxu0 0
    %608 = vmatpush2.bf16.msra.mxu0 0
    %609 = vmatprep.subr.bf16.mxu0 0
    %610 = vmatpush2.bf16.msra.mxu0 0
    %611 = vmatprep.subr.bf16.mxu0 0
    %612 = vmatpush2.bf16.msra.mxu0 0
    %613 = vmatprep.subr.bf16.mxu0 0
    %614 = vmatpush2.bf16.msra.mxu0 0
    %615 = vmatprep.subr.bf16.mxu0 0
    %616 = vmatpush2.bf16.msra.mxu0 0
    %617 = vmatprep.mubr.bf16.mxu0 0
    %618 = vmatmul.mubr.bf16.gmra.mxu0 %v511
    %v619 = vpop.f32.mrf.mxu0
    %v620 = vadd.f32 %v535, %v619
    %v621 = vpop.f32.mrf.mxu0
    %v622 = vpop.f32.mrf.mxu0
    %v623 = vpop.f32.mrf.mxu0
    %624 = vdwg.mxu0
    %v625 = vmul.f32 %v620, 0.2
    %v626 = vmax.f32 %v620, %v625
    %v627 = vpack.c.bf16 %v626, %v626
    %s628 = scalar_lea.vmem [#allocation5], 256
    %v629 = vld [vmem:[%s628] sm:$0xf]
    %v630 = vld [vmem:[%s628 + $0x4] sm:$0xf]
    %v631 = vld [vmem:[%s628 + $0x8] sm:$0xf]
    %v632 = vld [vmem:[%s628 + $0xc] sm:$0xf]
    %v633 = vld [vmem:[%s628 + $0x10] sm:$0xf]
    %v634 = vld [vmem:[%s628 + $0x14] sm:$0xf]
    %v635 = vld [vmem:[%s628 + $0x18] sm:$0xf]
    %v636 = vld [vmem:[%s628 + $0x1c] sm:$0xf]
    %v637 = vld [vmem:[%s628 + $0x20] sm:$0xf]
    %v638 = vld [vmem:[%s628 + $0x24] sm:$0xf]
    %v639 = vld [vmem:[%s628 + $0x28] sm:$0xf]
    %v640 = vld [vmem:[%s628 + $0x2c] sm:$0xf]
    %v641 = vld [vmem:[%s628 + $0x30] sm:$0xf]
    %v642 = vld [vmem:[%s628 + $0x34] sm:$0xf]
    %v643 = vld [vmem:[%s628 + $0x38] sm:$0xf]
    %v644 = vld [vmem:[%s628 + $0x3c] sm:$0xf]
    %s645 = scalar_lea.vmem %s4, 4
    %v646 = vld [vmem:[%s645] sm:$0x1]
    %v648 = vlaneseq
    %v649 = vshrl.u32 %v648, 7
    %v650 = vsub.s32 0, %v649
    %v651 = vrot.slane %v646, %v650
    %v669 = vunpack.c.l.b16 %v629
    %v670 = vunpack.c.l.b16 %v630
    %v671 = vunpack.c.l.b16 %v631
    %v672 = vunpack.c.l.b16 %v632
    %v673 = vunpack.c.l.b16 %v633
    %v674 = vunpack.c.l.b16 %v634
    %v675 = vunpack.c.l.b16 %v635
    %v676 = vunpack.c.l.b16 %v636
    %v677 = vunpack.c.l.b16 %v637
    %v678 = vunpack.c.l.b16 %v638
    %v679 = vunpack.c.l.b16 %v639
    %v680 = vunpack.c.l.b16 %v640
    %v681 = vunpack.c.l.b16 %v641
    %v682 = vunpack.c.l.b16 %v642
    %v683 = vunpack.c.l.b16 %v643
    %v684 = vunpack.c.l.b16 %v644
    %v685 = vpack.c.b16 %v670, %v669
    %v686 = vpack.c.b16 %v672, %v671
    %v687 = vpack.c.b16 %v674, %v673
    %v688 = vpack.c.b16 %v676, %v675
    %v689 = vpack.c.b16 %v678, %v677
    %v690 = vpack.c.b16 %v680, %v679
    %v691 = vpack.c.b16 %v682, %v681
    %v692 = vpack.c.b16 %v684, %v683
    %701 = vmatprep.subr.bf16.mxu0 0
    %702 = vmatpush1.bf16.msra.mxu0 %v692
    %703 = vmatprep.subr.bf16.mxu0 0
    %704 = vmatpush1.bf16.msra.mxu0 %v691
    %705 = vmatprep.subr.bf16.mxu0 0
    %706 = vmatpush1.bf16.msra.mxu0 %v690
    %707 = vmatprep.subr.bf16.mxu0 0
    %708 = vmatpush1.bf16.msra.mxu0 %v689
    %709 = vmatprep.subr.bf16.mxu0 0
    %710 = vmatpush1.bf16.msra.mxu0 %v688
    %711 = vmatprep.subr.bf16.mxu0 0
    %712 = vmatpush1.bf16.msra.mxu0 %v687
    %713 = vmatprep.subr.bf16.mxu0 0
    %714 = vmatpush1.bf16.msra.mxu0 %v686
    %715 = vmatprep.subr.bf16.mxu0 0
    %716 = vmatpush1.bf16.msra.mxu0 %v685
    %717 = vmatprep.subr.bf16.mxu0 0
    %718 = vmatpush2.bf16.msra.mxu0 0
    %719 = vmatprep.subr.bf16.mxu0 0
    %720 = vmatpush2.bf16.msra.mxu0 0
    %721 = vmatprep.subr.bf16.mxu0 0
    %722 = vmatpush2.bf16.msra.mxu0 0
    %723 = vmatprep.subr.bf16.mxu0 0
    %724 = vmatpush2.bf16.msra.mxu0 0
    %725 = vmatprep.subr.bf16.mxu0 0
    %726 = vmatpush2.bf16.msra.mxu0 0
    %727 = vmatprep.subr.bf16.mxu0 0
    %728 = vmatpush2.bf16.msra.mxu0 0
    %729 = vmatprep.subr.bf16.mxu0 0
    %730 = vmatpush2.bf16.msra.mxu0 0
    %731 = vmatprep.subr.bf16.mxu0 0
    %732 = vmatpush2.bf16.msra.mxu0 0
    %733 = vmatprep.mubr.bf16.mxu0 0
    %734 = vmatmul.mubr.bf16.gmra.mxu0 %v627
    %v735 = vpop.f32.mrf.mxu0
    %v736 = vadd.f32 %v651, %v735
    %v737 = vpop.f32.mrf.mxu0
    %v738 = vpop.f32.mrf.mxu0
    %v739 = vpop.f32.mrf.mxu0
    %740 = vdwg.mxu0
    %v741 = vmul.f32 %v736, 0.2
    %v742 = vmax.f32 %v736, %v741
    %v743 = vpack.c.bf16 %v742, %v742
    %s744 = scalar_lea.vmem [#allocation5], 320
    %v745 = vld [vmem:[%s744] sm:$0xf]
    %v746 = vld [vmem:[%s744 + $0x4] sm:$0xf]
    %v747 = vld [vmem:[%s744 + $0x8] sm:$0xf]
    %v748 = vld [vmem:[%s744 + $0xc] sm:$0xf]
    %v749 = vld [vmem:[%s744 + $0x10] sm:$0xf]
    %v750 = vld [vmem:[%s744 + $0x14] sm:$0xf]
    %v751 = vld [vmem:[%s744 + $0x18] sm:$0xf]
    %v752 = vld [vmem:[%s744 + $0x1c] sm:$0xf]
    %v753 = vld [vmem:[%s744 + $0x20] sm:$0xf]
    %v754 = vld [vmem:[%s744 + $0x24] sm:$0xf]
    %v755 = vld [vmem:[%s744 + $0x28] sm:$0xf]
    %v756 = vld [vmem:[%s744 + $0x2c] sm:$0xf]
    %v757 = vld [vmem:[%s744 + $0x30] sm:$0xf]
    %v758 = vld [vmem:[%s744 + $0x34] sm:$0xf]
    %v759 = vld [vmem:[%s744 + $0x38] sm:$0xf]
    %v760 = vld [vmem:[%s744 + $0x3c] sm:$0xf]
    %s761 = scalar_lea.vmem %s4, 5
    %v762 = vld [vmem:[%s761] sm:$0x1]
    %v764 = vlaneseq
    %v765 = vshrl.u32 %v764, 7
    %v766 = vsub.s32 0, %v765
    %v767 = vrot.slane %v762, %v766
    %v785 = vunpack.c.l.b16 %v745
    %v786 = vunpack.c.l.b16 %v746
    %v787 = vunpack.c.l.b16 %v747
    %v788 = vunpack.c.l.b16 %v748
    %v789 = vunpack.c.l.b16 %v749
    %v790 = vunpack.c.l.b16 %v750
    %v791 = vunpack.c.l.b16 %v751
    %v792 = vunpack.c.l.b16 %v752
    %v793 = vunpack.c.l.b16 %v753
    %v794 = vunpack.c.l.b16 %v754
    %v795 = vunpack.c.l.b16 %v755
    %v796 = vunpack.c.l.b16 %v756
    %v797 = vunpack.c.l.b16 %v757
    %v798 = vunpack.c.l.b16 %v758
    %v799 = vunpack.c.l.b16 %v759
    %v800 = vunpack.c.l.b16 %v760
    %v801 = vpack.c.b16 %v786, %v785
    %v802 = vpack.c.b16 %v788, %v787
    %v803 = vpack.c.b16 %v790, %v789
    %v804 = vpack.c.b16 %v792, %v791
    %v805 = vpack.c.b16 %v794, %v793
    %v806 = vpack.c.b16 %v796, %v795
    %v807 = vpack.c.b16 %v798, %v797
    %v808 = vpack.c.b16 %v800, %v799
    %817 = vmatprep.subr.bf16.mxu0 0
    %818 = vmatpush1.bf16.msra.mxu0 %v808
    %819 = vmatprep.subr.bf16.mxu0 0
    %820 = vmatpush1.bf16.msra.mxu0 %v807
    %821 = vmatprep.subr.bf16.mxu0 0
    %822 = vmatpush1.bf16.msra.mxu0 %v806
    %823 = vmatprep.subr.bf16.mxu0 0
    %824 = vmatpush1.bf16.msra.mxu0 %v805
    %825 = vmatprep.subr.bf16.mxu0 0
    %826 = vmatpush1.bf16.msra.mxu0 %v804
    %827 = vmatprep.subr.bf16.mxu0 0
    %828 = vmatpush1.bf16.msra.mxu0 %v803
    %829 = vmatprep.subr.bf16.mxu0 0
    %830 = vmatpush1.bf16.msra.mxu0 %v802
    %831 = vmatprep.subr.bf16.mxu0 0
    %832 = vmatpush1.bf16.msra.mxu0 %v801
    %833 = vmatprep.subr.bf16.mxu0 0
    %834 = vmatpush2.bf16.msra.mxu0 0
    %835 = vmatprep.subr.bf16.mxu0 0
    %836 = vmatpush2.bf16.msra.mxu0 0
    %837 = vmatprep.subr.bf16.mxu0 0
    %838 = vmatpush2.bf16.msra.mxu0 0
    %839 = vmatprep.subr.bf16.mxu0 0
    %840 = vmatpush2.bf16.msra.mxu0 0
    %841 = vmatprep.subr.bf16.mxu0 0
    %842 = vmatpush2.bf16.msra.mxu0 0
    %843 = vmatprep.subr.bf16.mxu0 0
    %844 = vmatpush2.bf16.msra.mxu0 0
    %845 = vmatprep.subr.bf16.mxu0 0
    %846 = vmatpush2.bf16.msra.mxu0 0
    %847 = vmatprep.subr.bf16.mxu0 0
    %848 = vmatpush2.bf16.msra.mxu0 0
    %849 = vmatprep.mubr.bf16.mxu0 0
    %850 = vmatmul.mubr.bf16.gmra.mxu0 %v743
    %v851 = vpop.f32.mrf.mxu0
    %v852 = vadd.f32 %v767, %v851
    %v853 = vpop.f32.mrf.mxu0
    %v854 = vpop.f32.mrf.mxu0
    %v855 = vpop.f32.mrf.mxu0
    %856 = vdwg.mxu0
    %v857 = vmul.f32 %v852, 0.2
    %v858 = vmax.f32 %v852, %v857
    %v859 = vpack.c.bf16 %v858, %v858
    %s860 = scalar_lea.vmem [#allocation5], 384
    %v861 = vld [vmem:[%s860] sm:$0xf]
    %v862 = vld [vmem:[%s860 + $0x4] sm:$0xf]
    %v863 = vld [vmem:[%s860 + $0x8] sm:$0xf]
    %v864 = vld [vmem:[%s860 + $0xc] sm:$0xf]
    %v865 = vld [vmem:[%s860 + $0x10] sm:$0xf]
    %v866 = vld [vmem:[%s860 + $0x14] sm:$0xf]
    %v867 = vld [vmem:[%s860 + $0x18] sm:$0xf]
    %v868 = vld [vmem:[%s860 + $0x1c] sm:$0xf]
    %v869 = vld [vmem:[%s860 + $0x20] sm:$0xf]
    %v870 = vld [vmem:[%s860 + $0x24] sm:$0xf]
    %v871 = vld [vmem:[%s860 + $0x28] sm:$0xf]
    %v872 = vld [vmem:[%s860 + $0x2c] sm:$0xf]
    %v873 = vld [vmem:[%s860 + $0x30] sm:$0xf]
    %v874 = vld [vmem:[%s860 + $0x34] sm:$0xf]
    %v875 = vld [vmem:[%s860 + $0x38] sm:$0xf]
    %v876 = vld [vmem:[%s860 + $0x3c] sm:$0xf]
    %s877 = scalar_lea.vmem %s4, 6
    %v878 = vld [vmem:[%s877] sm:$0x1]
    %v880 = vlaneseq
    %v881 = vshrl.u32 %v880, 7
    %v882 = vsub.s32 0, %v881
    %v883 = vrot.slane %v878, %v882
    %v901 = vunpack.c.l.b16 %v861
    %v902 = vunpack.c.l.b16 %v862
    %v903 = vunpack.c.l.b16 %v863
    %v904 = vunpack.c.l.b16 %v864
    %v905 = vunpack.c.l.b16 %v865
    %v906 = vunpack.c.l.b16 %v866
    %v907 = vunpack.c.l.b16 %v867
    %v908 = vunpack.c.l.b16 %v868
    %v909 = vunpack.c.l.b16 %v869
    %v910 = vunpack.c.l.b16 %v870
    %v911 = vunpack.c.l.b16 %v871
    %v912 = vunpack.c.l.b16 %v872
    %v913 = vunpack.c.l.b16 %v873
    %v914 = vunpack.c.l.b16 %v874
    %v915 = vunpack.c.l.b16 %v875
    %v916 = vunpack.c.l.b16 %v876
    %v917 = vpack.c.b16 %v902, %v901
    %v918 = vpack.c.b16 %v904, %v903
    %v919 = vpack.c.b16 %v906, %v905
    %v920 = vpack.c.b16 %v908, %v907
    %v921 = vpack.c.b16 %v910, %v909
    %v922 = vpack.c.b16 %v912, %v911
    %v923 = vpack.c.b16 %v914, %v913
    %v924 = vpack.c.b16 %v916, %v915
    %933 = vmatprep.subr.bf16.mxu0 0
    %934 = vmatpush1.bf16.msra.mxu0 %v924
    %935 = vmatprep.subr.bf16.mxu0 0
    %936 = vmatpush1.bf16.msra.mxu0 %v923
    %937 = vmatprep.subr.bf16.mxu0 0
    %938 = vmatpush1.bf16.msra.mxu0 %v922
    %939 = vmatprep.subr.bf16.mxu0 0
    %940 = vmatpush1.bf16.msra.mxu0 %v921
    %941 = vmatprep.subr.bf16.mxu0 0
    %942 = vmatpush1.bf16.msra.mxu0 %v920
    %943 = vmatprep.subr.bf16.mxu0 0
    %944 = vmatpush1.bf16.msra.mxu0 %v919
    %945 = vmatprep.subr.bf16.mxu0 0
    %946 = vmatpush1.bf16.msra.mxu0 %v918
    %947 = vmatprep.subr.bf16.mxu0 0
    %948 = vmatpush1.bf16.msra.mxu0 %v917
    %949 = vmatprep.subr.bf16.mxu0 0
    %950 = vmatpush2.bf16.msra.mxu0 0
    %951 = vmatprep.subr.bf16.mxu0 0
    %952 = vmatpush2.bf16.msra.mxu0 0
    %953 = vmatprep.subr.bf16.mxu0 0
    %954 = vmatpush2.bf16.msra.mxu0 0
    %955 = vmatprep.subr.bf16.mxu0 0
    %956 = vmatpush2.bf16.msra.mxu0 0
    %957 = vmatprep.subr.bf16.mxu0 0
    %958 = vmatpush2.bf16.msra.mxu0 0
    %959 = vmatprep.subr.bf16.mxu0 0
    %960 = vmatpush2.bf16.msra.mxu0 0
    %961 = vmatprep.subr.bf16.mxu0 0
    %962 = vmatpush2.bf16.msra.mxu0 0
    %963 = vmatprep.subr.bf16.mxu0 0
    %964 = vmatpush2.bf16.msra.mxu0 0
    %965 = vmatprep.mubr.bf16.mxu0 0
    %966 = vmatmul.mubr.bf16.gmra.mxu0 %v859
    %v967 = vpop.f32.mrf.mxu0
    %v968 = vadd.f32 %v883, %v967
    %v969 = vpop.f32.mrf.mxu0
    %v970 = vpop.f32.mrf.mxu0
    %v971 = vpop.f32.mrf.mxu0
    %972 = vdwg.mxu0
    %v973 = vmul.f32 %v968, 0.2
    %v974 = vmax.f32 %v968, %v973
    %975 = vst [vmem:[#allocation7] sm:$0xff] %v974
    // Predicated region
    $region30: #{_mapping_forward.1} parent=1 // pred_check
      _
    $region31: #{_mapping_forward.1} parent=1 // pred_check_branch
      %977 = sbr.rel (0) target = $region33
    $region32: #{_mapping_forward.1} parent=1 // pred_region
      %s979 = ssub.s32 128, 128
      %980 = vsyncadd [#allocation4], %s979
      %s982 = sshll.u32 [#allocation7], 4
      %s983 = int_to_ptr.vmem [resolvable:$true] %s982
      %985 = dma.vmem_to_hbm [thread:$0]  %s983, 128, %s5, [#allocation4]
    $region33: #{_mapping_forward.1} parent=1 // pred_fallthru
      _
    // Predicated region
    $region34: #{_mapping_forward.1} parent=1 // pred_check
      _
    $region35: #{_mapping_forward.1} parent=1 // pred_check_branch
      %987 = sbr.rel (0) target = $region37
    $region36: #{_mapping_forward.1} parent=1 // pred_region
      %988 = dma.done [#allocation4], 128
    $region37: #{_mapping_forward.1} parent=1 // pred_fallthru
      _
    %989 = vsyncpa [#allocation3], 1
    %990 = vsyncpa [#allocation6], 1
    %991 = vsyncpa [#allocation4], 1

</llo_original>
